<compile_context>
chip_gen: v5e
topology: v5e:2x2
jax: 0.10.0
libtpu: 0.0.40
codegen_flags: <defaults>
</compile_context>

<pallas_src>
import jax
import jax.numpy as jnp
from jax.experimental import pallas as pl
from jax.experimental.pallas import tpu as pltpu

LANE = 128      # vreg lane width
SUBLANE = 8     # vreg sublane width (f32)


def _round_up(x, m):
    return (x + m - 1) // m * m


def linear_kernel(x_ref, w_ref, b_ref, o_ref):
    # x_ref: (TB, K)   w_ref: (K, N)   b_ref: (1, N)   o_ref: (TB, N)
    acc = jnp.dot(x_ref[...], w_ref[...], preferred_element_type=jnp.float32)
    o_ref[...] = (acc + b_ref[...]).astype(o_ref.dtype)


def _pick_batch_tile(B, K, N, in_itemsize, out_itemsize, block_b, vmem_budget_bytes):
    """Largest batch tile (multiple of 8) whose double-buffered in+out blocks
    fit the VMEM budget. K and N lanes are counted as padded to 128 (VMEM tile
    layout), regardless of the logical block width."""
    k_lanes = _round_up(K, LANE)
    n_lanes = _round_up(N, LANE)
    row_bytes = k_lanes * in_itemsize + n_lanes * out_itemsize
    max_rows = max(SUBLANE, vmem_budget_bytes // (2 * row_bytes))  # 2 = double buffer
    tb = min(block_b, max_rows)
    tb = max(SUBLANE, (tb // SUBLANE) * SUBLANE)
    if B <= tb:
        return B          # one full-extent block (always a legal block shape)
    return tb


def classification_submodel_forward(x, w_t, b, *, block_b=4096,
                                    compute_dtype=None,
                                    pad_output_lanes=False,
                                    vmem_budget_bytes=24 * 1024 * 1024):
    """x: [batch, seq_len], w_t: [seq_len, num_group], b: [num_group]
    -> [batch, num_group]  (== x @ w_t + b, i.e. nn.Linear forward)."""
    B, K = x.shape
    Kw, N = w_t.shape
    assert K == Kw
    out_dtype = x.dtype
    block_b = max(SUBLANE, (block_b // SUBLANE) * SUBLANE)

    # Optional reduced-precision compute (f32 accumulation on the MXU). Note:
    # casting here adds a separate XLA pass; only a win if x/w are already
    # produced in `compute_dtype` upstream.
    if compute_dtype is not None:
        x = x.astype(compute_dtype)
        w_t = w_t.astype(compute_dtype)

    if pad_output_lanes:
        # Lane-dense (unmasked) output stores; costs N_pad/N write amplification.
        N_out = _round_up(N, LANE)
        if N_out != N:
            w_t = jnp.pad(w_t, ((0, 0), (0, N_out - N)))
            b_p = jnp.pad(b, (0, N_out - N))
        else:
            b_p = b
    else:
        # True-width output: minimal HBM writeback, contiguous row DMA.
        N_out = N
        b_p = b
    b_p = b_p.reshape(1, N_out).astype(jnp.float32)   # bias added in f32 acc

    TB = _pick_batch_tile(B, K, N_out,
                          jnp.dtype(x.dtype).itemsize,
                          jnp.dtype(out_dtype).itemsize,
                          block_b, vmem_budget_bytes)
    grid = (pl.cdiv(B, TB),)

    out = pl.pallas_call(
        linear_kernel,
        out_shape=jax.ShapeDtypeStruct((B, N_out), out_dtype),
        grid_spec=pltpu.PrefetchScalarGridSpec(
            num_scalar_prefetch=0,
            grid=grid,
            in_specs=[
                # x: tiled over batch, pipelined HBM->VMEM
                pl.BlockSpec((TB, K), lambda i: (i, 0)),
                # weights / bias: resident across all batch tiles (DMA'd once)
                pl.BlockSpec((K, N_out), lambda i: (0, 0)),
                pl.BlockSpec((1, N_out), lambda i: (0, 0)),
            ],
            out_specs=pl.BlockSpec((TB, N_out), lambda i: (i, 0)),
        ),
        compiler_params=pltpu.CompilerParams(
            # batch tiles are independent -> shard across TCs on v7x
            dimension_semantics=("parallel",),
        ),
    )(x, w_t, b_p)

    if N_out != N:
        out = out[:, :N]
    return out


if __name__ == "__main__":
    # Small shapes consistent with the module: seq_len=32 features, num_group=8 classes.
    batch, seq_len, num_group = 2, 32, 8

    key = jax.random.PRNGKey(0)
    kx, kw, kb = jax.random.split(key, 3)

    x = jax.random.normal(kx, (batch, seq_len), dtype=jnp.float32)
    # Deterministic parameter init (mimics nn.Linear uniform(-1/sqrt(fan_in), 1/sqrt(fan_in)))
    bound = 1.0 / (seq_len ** 0.5)
    w = jax.random.uniform(kw, (num_group, seq_len), minval=-bound, maxval=bound,
                           dtype=jnp.float32)  # PyTorch stores (out, in)
    b = jax.random.uniform(kb, (num_group,), minval=-bound, maxval=bound,
                           dtype=jnp.float32)
    w_t = w.T  # [seq_len, num_group] for the kernel

    ref = x @ w.T + b

    # --- default path: true-width output, single tile ---
    out = jax.block_until_ready(classification_submodel_forward(x, w_t, b))
    assert out.shape == (batch, num_group)
    assert jnp.allclose(out, ref, atol=1e-5, rtol=1e-5)

    # --- lane-padded-output variant ---
    out_p = jax.block_until_ready(
        classification_submodel_forward(x, w_t, b, pad_output_lanes=True))
    assert out_p.shape == (batch, num_group)
    assert jnp.allclose(out_p, ref, atol=1e-5, rtol=1e-5)

    # --- bf16-compute variant, f32 accumulation ---
    out_bf = jax.block_until_ready(
        classification_submodel_forward(x, w_t, b, compute_dtype=jnp.bfloat16))
    x_q = x.astype(jnp.bfloat16).astype(jnp.float32)
    w_q = w_t.astype(jnp.bfloat16).astype(jnp.float32)
    ref_bf = x_q @ w_q + b
    assert jnp.allclose(out_bf, ref_bf, atol=1e-3, rtol=1e-3)

    # --- multi-tile path: grid > 1 with a partial final batch tile ---
    batch2 = 300
    x2 = jax.random.normal(jax.random.PRNGKey(1), (batch2, seq_len), dtype=jnp.float32)
    out2 = jax.block_until_ready(
        classification_submodel_forward(x2, w_t, b, block_b=128))
    ref2 = x2 @ w.T + b
    assert out2.shape == (batch2, num_group)
    assert jnp.allclose(out2, ref2, atol=1e-5, rtol=1e-5)

    print("KERNEL_OK")
</pallas_src>

<mosaic_0001>
module attributes {stable_mosaic.version = 11 : i64} {
  func.func @linear_kernel(%arg0: i32, %arg1: memref<2x32xf32, #tpu.memory_space<vmem>>, %arg2: memref<32x8xf32, #tpu.memory_space<vmem>>, %arg3: memref<1x8xf32, #tpu.memory_space<vmem>>, %arg4: memref<2x8xf32, #tpu.memory_space<vmem>>) attributes {dimension_semantics = [#tpu.dimension_semantics<parallel>], iteration_bounds = array<i64: 1>, scalar_prefetch = 0 : i64, scratch_operands = 0 : i64, tpu.core_type = #tpu.core_type<tc>, window_params = [{transform_indices = @transform_0, window_bounds = array<i64: 2, 32>}, {pipeline_mode = #tpu.pipeline_mode<synchronous>, transform_indices = @transform_1, window_bounds = array<i64: 32, 8>}, {pipeline_mode = #tpu.pipeline_mode<synchronous>, transform_indices = @transform_2, window_bounds = array<i64: 1, 8>}, {transform_indices = @transform_3, window_bounds = array<i64: 2, 8>}]} {
    %c0 = arith.constant 0 : index
    %c0_0 = arith.constant 0 : index
    %0 = vector.load %arg1[%c0, %c0_0] : memref<2x32xf32, #tpu.memory_space<vmem>>, vector<2x32xf32>
    %c0_1 = arith.constant 0 : index
    %c0_2 = arith.constant 0 : index
    %1 = vector.load %arg2[%c0_1, %c0_2] : memref<32x8xf32, #tpu.memory_space<vmem>>, vector<32x8xf32>
    %cst = arith.constant dense<0.000000e+00> : vector<2x8xf32>
    %2 = tpu.matmul %0, %1, %cst {dimension_numbers = #tpu.dot_dimension_numbers<[1], [0], [0], [1], [0, 0, 1, 1], [], []>} : vector<2x32xf32>, vector<32x8xf32>, vector<2x8xf32> -> vector<2x8xf32>
    %c0_3 = arith.constant 0 : index
    %c0_4 = arith.constant 0 : index
    %3 = vector.load %arg3[%c0_3, %c0_4] : memref<1x8xf32, #tpu.memory_space<vmem>>, vector<1x8xf32>
    %4 = vector.broadcast %3 : vector<1x8xf32> to vector<2x8xf32>
    %5 = arith.addf %2, %4 : vector<2x8xf32>
    %c0_5 = arith.constant 0 : index
    %c0_6 = arith.constant 0 : index
    %6 = vector.load %arg4[%c0_5, %c0_6] : memref<2x8xf32, #tpu.memory_space<vmem>>, vector<2x8xf32>
    tpu.vector_store %arg4[%c0_5, %c0_6], %5 {strides = array<i32>} : memref<2x8xf32, #tpu.memory_space<vmem>>, vector<2x8xf32>,
    return
  }
  func.func @transform_0(%arg0: i32) -> (i32, i32) {
    %c0_i32 = arith.constant 0 : i32
    %c0_i32_0 = arith.constant 0 : i32
    return %arg0, %c0_i32 : i32, i32
  }
  func.func @transform_1(%arg0: i32) -> (i32, i32) {
    %c0_i32 = arith.constant 0 : i32
    %c0_i32_0 = arith.constant 0 : i32
    %c0_i32_1 = arith.constant 0 : i32
    return %c0_i32, %c0_i32_0 : i32, i32
  }
  func.func @transform_2(%arg0: i32) -> (i32, i32) {
    %c0_i32 = arith.constant 0 : i32
    %c0_i32_0 = arith.constant 0 : i32
    %c0_i32_1 = arith.constant 0 : i32
    return %c0_i32, %c0_i32_0 : i32, i32
  }
  func.func @transform_3(%arg0: i32) -> (i32, i32) {
    %c0_i32 = arith.constant 0 : i32
    %c0_i32_0 = arith.constant 0 : i32
    return %arg0, %c0_i32 : i32, i32
  }
}

</mosaic_0001>

<llo_original>
// kernel: tpu_custom_call.1
$region0: #{tpu_custom_call.1}
  #allocation0 [shape = 'u32[]', space=smem, size = 0x4, offset = 0x4, fixed_abs, tag = 'smem constant byte address 0x4 - core index']
  #allocation1 [shape = 'u32[72,128]{1,0:T(1,128)}', space=vmem, size = 0x9000, scoped, tag = 'internal scratch']
  %s0 = inlined_call_operand.vmem [shape: f32[2,32], index: 0, kind: input, shape index: {}]
  %s1 = inlined_call_operand.vmem [shape: f32[32,8], index: 1, kind: input, shape index: {}]
  %s2 = inlined_call_operand.vmem [shape: f32[1,8], index: 2, kind: input, shape index: {}]
  %s3 = inlined_call_operand.hbm [shape: f32[2,8], index: 3, kind: output, shape index: {}]
  %s4 = sld [smem:[#allocation0]]
  $region22: #{tpu_custom_call.1} parent=0
    _
  %s6 = ssub.s32 1, %s4
  %s7 = scalar_select 0, %s6, %s4
  $region1: #{tpu_custom_call.1} parent=0
    #allocation2 [shape = 'u8[1024]{0}', space=vmem, size = 0x400, scoped, tag = 'output window, operand 0, single buffered']
    #allocation3 [shape = 's32[1]{0}', space=sflag, size = 0x4, scoped, tag = 'scoped memory for tpu_custom_call.1']
    %8 = vsyncpa [#allocation3], 0
    // Predicated region
    $region2: #{tpu_custom_call.1} parent=1 // pred_check
      _
    $region3: #{tpu_custom_call.1} parent=1 // pred_check_branch
      %10 = sbr.rel (0) target = $region5
    $region4: #{tpu_custom_call.1} parent=1 // pred_region
      _
    $region5: #{tpu_custom_call.1} parent=1 // pred_fallthru
      _
    // Predicated region
    $region6: #{tpu_custom_call.1} parent=1 // pred_check
      _
    $region7: #{tpu_custom_call.1} parent=1 // pred_check_branch
      %12 = sbr.rel (0) target = $region9
    $region8: #{tpu_custom_call.1} parent=1 // pred_region
      _
    $region9: #{tpu_custom_call.1} parent=1 // pred_fallthru
      _
    // Predicated region
    $region10: #{tpu_custom_call.1} parent=1 // pred_check
      _
    $region11: #{tpu_custom_call.1} parent=1 // pred_check_branch
      %14 = sbr.rel (0) target = $region13
    $region12: #{tpu_custom_call.1} parent=1 // pred_region
      _
    $region13: #{tpu_custom_call.1} parent=1 // pred_fallthru
      _
    %v15 = vld [vmem:[%s0] sm:$0x3]
    %v16 = vld [vmem:[%s1] sm:$0xff]
    %v17 = vld [vmem:[%s1 + $0x8] sm:$0xff]
    %v18 = vld [vmem:[%s1 + $0x10] sm:$0xff]
    %v19 = vld [vmem:[%s1 + $0x18] sm:$0xff]
    %v20 = vld [vmem:[%s2] sm:$0x1]
    %v22 = vperm.slane %v20, 0
    %vm24 = vcmask 261120
    %v26 = vsel %vm24, %v15, 0
    %28 = vmatpush.msra.mxu0 0.0
    %29 = vmatpush.msra.mxu0 0.0
    %30 = vmatpush.msra.mxu0 0.0
    %31 = vmatpush.msra.mxu0 0.0
    %32 = vmatpush.msra.mxu0 0.0
    %33 = vmatpush.msra.mxu0 0.0
    %34 = vmatpush.msra.mxu0 0.0
    %35 = vmatpush.msra.mxu0 0.0
    %36 = vmatpush.msra.mxu0 0.0
    %37 = vmatpush.msra.mxu0 0.0
    %38 = vmatpush.msra.mxu0 0.0
    %39 = vmatpush.msra.mxu0 0.0
    %40 = vmatpush.msra.mxu0 %v19
    %41 = vmatpush.msra.mxu0 %v18
    %42 = vmatpush.msra.mxu0 %v17
    %43 = vmatpush.msra.mxu0 %v16
    %44 = vmatmul.f32.gmra.mxu0 %v26
    %v45 = vpop.f32.mrf.mxu0
    %v46 = vadd.f32 %v22, %v45
    %47 = vdwg.mxu0
    %vm48 = vcmask 58368
    %49 = vst.msk [vmem:[#allocation2] sm:$0x3] %vm48, %v46
    // Predicated region
    $region14: #{tpu_custom_call.1} parent=1 // pred_check
      _
    $region15: #{tpu_custom_call.1} parent=1 // pred_check_branch
      %51 = sbr.rel (0) target = $region17
    $region16: #{tpu_custom_call.1} parent=1 // pred_region
      %53 = vsyncadd [#allocation3], 0
      %s55 = sshll.u32 [#allocation2], 4
      %s56 = int_to_ptr.vmem [resolvable:$true] %s55
      %s57 = sshll.u32 %s3, 4
      %s58 = int_to_ptr.hbm [resolvable:$true] %s57
      %60 = dma.vmem_to_hbm [thread:$0]  %s56, 32, %s58, [#allocation3]
    $region17: #{tpu_custom_call.1} parent=1 // pred_fallthru
      _
    // Predicated region
    $region18: #{tpu_custom_call.1} parent=1 // pred_check
      _
    $region19: #{tpu_custom_call.1} parent=1 // pred_check_branch
      %62 = sbr.rel (0) target = $region21
    $region20: #{tpu_custom_call.1} parent=1 // pred_region
      %64 = dma.done [#allocation3], 32
    $region21: #{tpu_custom_call.1} parent=1 // pred_fallthru
      _
    %65 = vsyncpa [#allocation3], 1

</llo_original>
